<compile_context>
chip_gen: v7x
topology: tpu7x:2x2x1
jax: 0.10.0
libtpu: 0.0.40
codegen_flags: <defaults>
</compile_context>

<pallas_src>
import functools

import jax
import jax.numpy as jnp
from jax import lax
from jax.experimental import pallas as pl
from jax.experimental.pallas import tpu as pltpu

_LN_EPS = 1e-5  # torch.nn.LayerNorm default eps


def _round_up(n, m):
    return ((n + m - 1) // m) * m


def _ln(x, gamma, beta):
    """PyTorch-style LayerNorm over the last axis (biased variance)."""
    mean = jnp.mean(x, axis=-1, keepdims=True)
    cent = x - mean
    var = jnp.mean(cent * cent, axis=-1, keepdims=True)
    scale = gamma * lax.rsqrt(var + _LN_EPS)           # fuse gamma into the rescale
    return cent * scale + beta


def _encoder_kernel(num_en, x_ref, w_ref, outs_ref):
    # x_ref    : (rows_block, D)            block of the flattened (B*S, D) input
    # w_ref    : (6 * num_en, D)            stacked LN params, layout per layer:
    #                                       [g1, b1, g2, b2, g_out, b_out]
    # outs_ref : (num_en, rows_block, D)    per-layer encoder outputs
    h = x_ref[...].astype(jnp.float32)
    w = w_ref[...].astype(jnp.float32)
    for layer in range(num_en):  # static unroll; num_en is small & known at trace time
        base = 6 * layer
        g1, b1 = w[base + 0][None, :], w[base + 1][None, :]
        g2, b2 = w[base + 2][None, :], w[base + 3][None, :]
        go, bo = w[base + 4][None, :], w[base + 5][None, :]
        # Encoder_Block with NAS_coding (1, 1, 0): atten/ffn/local are all Zero,
        # so every residual add is the identity and the block is LN2(LN1(h)).
        h = _ln(h, g1, b1)
        h = _ln(h, g2, b2)
        outs_ref[layer, :, :] = _ln(h, go, bo).astype(outs_ref.dtype)


def transformer_encoder(x, ln1_g, ln1_b, ln2_g, ln2_b, lno_g, lno_b,
                        *, row_block=512):
    """Transformer_Encoder.forward on the NAS_coding=(1,1,0) path.

    x: (B, S, D) float32.  ln*_g / ln*_b: (num_en, D) LayerNorm weight / bias.
    Returns a list of num_en arrays, each of shape (B, S, D).
    """
    B, S, D = x.shape
    num_en = ln1_g.shape[0]
    R = B * S
    x2 = x.reshape(R, D)

    # Stack the 6 per-layer LayerNorm params into one (6*num_en, D) slab:
    # a single small DMA per grid step instead of six.
    w = jnp.stack([ln1_g, ln1_b, ln2_g, ln2_b, lno_g, lno_b], axis=1)  # (num_en,6,D)
    w = w.reshape(6 * num_en, D).astype(jnp.float32)

    # Pick the row-block size: as large as possible (fewer grid steps, bigger DMAs)
    # while keeping the working set (input + num_en outputs, double-buffered, f32
    # compute copy) well under the default VMEM budget.
    bytes_per_row = 4 * D * (2 + 2 * num_en)            # x (2 bufs) + outs (2 bufs)
    vmem_budget = 8 * 1024 * 1024
    max_rows = max(8, (vmem_budget // max(bytes_per_row, 1)) // 8 * 8)
    row_block = min(row_block, max_rows)

    if R <= row_block:
        rows_block = _round_up(R, 8)
        r_pad = rows_block
    else:
        rows_block = row_block                           # multiple of 8; VMEM-friendly
        r_pad = _round_up(R, rows_block)
    if r_pad != R:
        x2 = jnp.pad(x2, ((0, r_pad - R), (0, 0)))       # padded rows sliced off below
    grid = (r_pad // rows_block,)

    # All ops are row-local, so every encoder block is fused into ONE pallas_call:
    # a single HBM read of x produces all num_en outputs directly (no intermediate
    # HBM round-trips).
    outs = pl.pallas_call(
        functools.partial(_encoder_kernel, num_en),
        out_shape=jax.ShapeDtypeStruct((num_en, r_pad, D), x.dtype),
        grid_spec=pltpu.PrefetchScalarGridSpec(
            num_scalar_prefetch=0,
            grid=grid,
            in_specs=[pl.BlockSpec((rows_block, D), lambda r: (r, 0)),
                      pl.BlockSpec((6 * num_en, D), lambda r: (0, 0))],
            out_specs=pl.BlockSpec((num_en, rows_block, D),
                                   lambda r: (0, r, 0)),
        ),
        compiler_params=pltpu.CompilerParams(
            # Row blocks are independent -> shard across the 2 TCs on v7x;
            # harmless no-op on v5e/v6e (single TC).
            dimension_semantics=("parallel",),
        ),
    )(x2, w)

    outs = outs[:, :R, :].reshape(num_en, B, S, D)
    return [outs[i] for i in range(num_en)]


# ----------------------------- pure-JAX reference -----------------------------
def _layer_norm_ref(x, g, b):
    mean = jnp.mean(x, axis=-1, keepdims=True)
    var = jnp.mean(jnp.square(x - mean), axis=-1, keepdims=True)
    return (x - mean) * lax.rsqrt(var + _LN_EPS) * g + b


def _transformer_encoder_ref(x, ln1_g, ln1_b, ln2_g, ln2_b, lno_g, lno_b):
    outs = []
    h = x
    for i in range(ln1_g.shape[0]):
        h = _layer_norm_ref(h, ln1_g[i], ln1_b[i])   # LN1; atten=Zero -> +skip = id
        h = _layer_norm_ref(h, ln2_g[i], ln2_b[i])   # LN2; ffn=Zero   -> +skip = id
        outs.append(_layer_norm_ref(h, lno_g[i], lno_b[i]))
    return outs


if __name__ == "__main__":
    key = jax.random.PRNGKey(0)
    B, S, D = 2, 8, 32       # batch=2, MAX_SEQ=8, EMBED_DIMS=32
    num_en = 2               # two encoder blocks (ENC_HEADS unused on the Zero path)
    ks = jax.random.split(key, 7)
    x = jax.random.normal(ks[0], (B, S, D), dtype=jnp.float32)
    ln1_g = 1.0 + 0.1 * jax.random.normal(ks[1], (num_en, D), dtype=jnp.float32)
    ln1_b = 0.1 * jax.random.normal(ks[2], (num_en, D), dtype=jnp.float32)
    ln2_g = 1.0 + 0.1 * jax.random.normal(ks[3], (num_en, D), dtype=jnp.float32)
    ln2_b = 0.1 * jax.random.normal(ks[4], (num_en, D), dtype=jnp.float32)
    lno_g = 1.0 + 0.1 * jax.random.normal(ks[5], (num_en, D), dtype=jnp.float32)
    lno_b = 0.1 * jax.random.normal(ks[6], (num_en, D), dtype=jnp.float32)

    outs = transformer_encoder(x, ln1_g, ln1_b, ln2_g, ln2_b, lno_g, lno_b)
    outs = jax.block_until_ready(outs)

    refs = _transformer_encoder_ref(x, ln1_g, ln1_b, ln2_g, ln2_b, lno_g, lno_b)
    assert len(outs) == num_en, (len(outs), num_en)
    for o, r in zip(outs, refs):
        assert o.shape == (B, S, D), o.shape
        assert o.dtype == x.dtype, o.dtype
        err = float(jnp.max(jnp.abs(o - r)))
        assert err < 1e-4, f"max abs err {err}"

    print("KERNEL_OK")
</pallas_src>

<mosaic_0001>
module attributes {stable_mosaic.version = 11 : i64} {
  func.func @_encoder_kernel(%arg0: i32, %arg1: memref<16x32xf32, #tpu.memory_space<vmem>>, %arg2: memref<12x32xf32, #tpu.memory_space<vmem>>, %arg3: memref<2x16x32xf32, #tpu.memory_space<vmem>>) attributes {dimension_semantics = [#tpu.dimension_semantics<parallel>], iteration_bounds = array<i64: 1>, scalar_prefetch = 0 : i64, scratch_operands = 0 : i64, tpu.core_type = #tpu.core_type<tc>, window_params = [{transform_indices = @transform_0, window_bounds = array<i64: 16, 32>}, {pipeline_mode = #tpu.pipeline_mode<synchronous>, transform_indices = @transform_1, window_bounds = array<i64: 12, 32>}, {transform_indices = @transform_2, window_bounds = array<i64: 2, 16, 32>}]} {
    %c0 = arith.constant 0 : index
    %c0_0 = arith.constant 0 : index
    %0 = vector.load %arg1[%c0, %c0_0] : memref<16x32xf32, #tpu.memory_space<vmem>>, vector<16x32xf32>
    %c0_1 = arith.constant 0 : index
    %c0_2 = arith.constant 0 : index
    %1 = vector.load %arg2[%c0_1, %c0_2] : memref<12x32xf32, #tpu.memory_space<vmem>>, vector<12x32xf32>
    %2 = vector.extract_strided_slice %1 {offsets = [0, 0], sizes = [1, 32], strides = [1, 1]} : vector<12x32xf32> to vector<1x32xf32>
    %3 = vector.shape_cast %2 : vector<1x32xf32> to vector<32xf32>
    %4 = vector.shape_cast %3 : vector<32xf32> to vector<1x32xf32>
    %5 = vector.extract_strided_slice %1 {offsets = [1, 0], sizes = [1, 32], strides = [1, 1]} : vector<12x32xf32> to vector<1x32xf32>
    %6 = vector.shape_cast %5 : vector<1x32xf32> to vector<32xf32>
    %7 = vector.shape_cast %6 : vector<32xf32> to vector<1x32xf32>
    %8 = vector.extract_strided_slice %1 {offsets = [2, 0], sizes = [1, 32], strides = [1, 1]} : vector<12x32xf32> to vector<1x32xf32>
    %9 = vector.shape_cast %8 : vector<1x32xf32> to vector<32xf32>
    %10 = vector.shape_cast %9 : vector<32xf32> to vector<1x32xf32>
    %11 = vector.extract_strided_slice %1 {offsets = [3, 0], sizes = [1, 32], strides = [1, 1]} : vector<12x32xf32> to vector<1x32xf32>
    %12 = vector.shape_cast %11 : vector<1x32xf32> to vector<32xf32>
    %13 = vector.shape_cast %12 : vector<32xf32> to vector<1x32xf32>
    %14 = vector.extract_strided_slice %1 {offsets = [4, 0], sizes = [1, 32], strides = [1, 1]} : vector<12x32xf32> to vector<1x32xf32>
    %15 = vector.shape_cast %14 : vector<1x32xf32> to vector<32xf32>
    %16 = vector.shape_cast %15 : vector<32xf32> to vector<1x32xf32>
    %17 = vector.extract_strided_slice %1 {offsets = [5, 0], sizes = [1, 32], strides = [1, 1]} : vector<12x32xf32> to vector<1x32xf32>
    %18 = vector.shape_cast %17 : vector<1x32xf32> to vector<32xf32>
    %19 = vector.shape_cast %18 : vector<32xf32> to vector<1x32xf32>
    %cst = arith.constant dense<0.000000e+00> : vector<16xf32>
    %20 = vector.multi_reduction <add>, %0, %cst [1] : vector<16x32xf32> to vector<16xf32>
    %21 = vector.shape_cast %20 : vector<16xf32> to vector<16x1xf32>
    %cst_3 = arith.constant 3.200000e+01 : f32
    %22 = vector.broadcast %cst_3 : f32 to vector<16x1xf32>
    %23 = arith.divf %21, %22 : vector<16x1xf32>
    %24 = vector.broadcast %23 : vector<16x1xf32> to vector<16x32xf32>
    %25 = arith.subf %0, %24 : vector<16x32xf32>
    %26 = arith.mulf %25, %25 : vector<16x32xf32>
    %cst_4 = arith.constant dense<0.000000e+00> : vector<16xf32>
    %27 = vector.multi_reduction <add>, %26, %cst_4 [1] : vector<16x32xf32> to vector<16xf32>
    %28 = vector.shape_cast %27 : vector<16xf32> to vector<16x1xf32>
    %cst_5 = arith.constant 3.200000e+01 : f32
    %29 = vector.broadcast %cst_5 : f32 to vector<16x1xf32>
    %30 = arith.divf %28, %29 : vector<16x1xf32>
    %cst_6 = arith.constant 9.99999974E-6 : f32
    %31 = vector.broadcast %cst_6 : f32 to vector<16x1xf32>
    %32 = arith.addf %30, %31 : vector<16x1xf32>
    %33 = math.rsqrt %32 : vector<16x1xf32>
    %34 = vector.broadcast %4 : vector<1x32xf32> to vector<16x32xf32>
    %35 = vector.broadcast %33 : vector<16x1xf32> to vector<16x32xf32>
    %36 = arith.mulf %34, %35 : vector<16x32xf32>
    %37 = arith.mulf %25, %36 : vector<16x32xf32>
    %38 = vector.broadcast %7 : vector<1x32xf32> to vector<16x32xf32>
    %39 = arith.addf %37, %38 : vector<16x32xf32>
    %cst_7 = arith.constant dense<0.000000e+00> : vector<16xf32>
    %40 = vector.multi_reduction <add>, %39, %cst_7 [1] : vector<16x32xf32> to vector<16xf32>
    %41 = vector.shape_cast %40 : vector<16xf32> to vector<16x1xf32>
    %cst_8 = arith.constant 3.200000e+01 : f32
    %42 = vector.broadcast %cst_8 : f32 to vector<16x1xf32>
    %43 = arith.divf %41, %42 : vector<16x1xf32>
    %44 = vector.broadcast %43 : vector<16x1xf32> to vector<16x32xf32>
    %45 = arith.subf %39, %44 : vector<16x32xf32>
    %46 = arith.mulf %45, %45 : vector<16x32xf32>
    %cst_9 = arith.constant dense<0.000000e+00> : vector<16xf32>
    %47 = vector.multi_reduction <add>, %46, %cst_9 [1] : vector<16x32xf32> to vector<16xf32>
    %48 = vector.shape_cast %47 : vector<16xf32> to vector<16x1xf32>
    %cst_10 = arith.constant 3.200000e+01 : f32
    %49 = vector.broadcast %cst_10 : f32 to vector<16x1xf32>
    %50 = arith.divf %48, %49 : vector<16x1xf32>
    %cst_11 = arith.constant 9.99999974E-6 : f32
    %51 = vector.broadcast %cst_11 : f32 to vector<16x1xf32>
    %52 = arith.addf %50, %51 : vector<16x1xf32>
    %53 = math.rsqrt %52 : vector<16x1xf32>
    %54 = vector.broadcast %10 : vector<1x32xf32> to vector<16x32xf32>
    %55 = vector.broadcast %53 : vector<16x1xf32> to vector<16x32xf32>
    %56 = arith.mulf %54, %55 : vector<16x32xf32>
    %57 = arith.mulf %45, %56 : vector<16x32xf32>
    %58 = vector.broadcast %13 : vector<1x32xf32> to vector<16x32xf32>
    %59 = arith.addf %57, %58 : vector<16x32xf32>
    %cst_12 = arith.constant dense<0.000000e+00> : vector<16xf32>
    %60 = vector.multi_reduction <add>, %59, %cst_12 [1] : vector<16x32xf32> to vector<16xf32>
    %61 = vector.shape_cast %60 : vector<16xf32> to vector<16x1xf32>
    %cst_13 = arith.constant 3.200000e+01 : f32
    %62 = vector.broadcast %cst_13 : f32 to vector<16x1xf32>
    %63 = arith.divf %61, %62 : vector<16x1xf32>
    %64 = vector.broadcast %63 : vector<16x1xf32> to vector<16x32xf32>
    %65 = arith.subf %59, %64 : vector<16x32xf32>
    %66 = arith.mulf %65, %65 : vector<16x32xf32>
    %cst_14 = arith.constant dense<0.000000e+00> : vector<16xf32>
    %67 = vector.multi_reduction <add>, %66, %cst_14 [1] : vector<16x32xf32> to vector<16xf32>
    %68 = vector.shape_cast %67 : vector<16xf32> to vector<16x1xf32>
    %cst_15 = arith.constant 3.200000e+01 : f32
    %69 = vector.broadcast %cst_15 : f32 to vector<16x1xf32>
    %70 = arith.divf %68, %69 : vector<16x1xf32>
    %cst_16 = arith.constant 9.99999974E-6 : f32
    %71 = vector.broadcast %cst_16 : f32 to vector<16x1xf32>
    %72 = arith.addf %70, %71 : vector<16x1xf32>
    %73 = math.rsqrt %72 : vector<16x1xf32>
    %74 = vector.broadcast %16 : vector<1x32xf32> to vector<16x32xf32>
    %75 = vector.broadcast %73 : vector<16x1xf32> to vector<16x32xf32>
    %76 = arith.mulf %74, %75 : vector<16x32xf32>
    %77 = arith.mulf %65, %76 : vector<16x32xf32>
    %78 = vector.broadcast %19 : vector<1x32xf32> to vector<16x32xf32>
    %79 = arith.addf %77, %78 : vector<16x32xf32>
    %c0_17 = arith.constant 0 : index
    %c0_18 = arith.constant 0 : index
    %c0_19 = arith.constant 0 : index
    %80 = vector.load %arg3[%c0_17, %c0_18, %c0_19] : memref<2x16x32xf32, #tpu.memory_space<vmem>>, vector<1x16x32xf32>
    %81 = vector.shape_cast %80 : vector<1x16x32xf32> to vector<16x32xf32>
    %82 = vector.shape_cast %79 : vector<16x32xf32> to vector<1x16x32xf32>
    tpu.vector_store %arg3[%c0_17, %c0_18, %c0_19], %82 {strides = array<i32>} : memref<2x16x32xf32, #tpu.memory_space<vmem>>, vector<1x16x32xf32>,
    %83 = vector.extract_strided_slice %1 {offsets = [6, 0], sizes = [1, 32], strides = [1, 1]} : vector<12x32xf32> to vector<1x32xf32>
    %84 = vector.shape_cast %83 : vector<1x32xf32> to vector<32xf32>
    %85 = vector.shape_cast %84 : vector<32xf32> to vector<1x32xf32>
    %86 = vector.extract_strided_slice %1 {offsets = [7, 0], sizes = [1, 32], strides = [1, 1]} : vector<12x32xf32> to vector<1x32xf32>
    %87 = vector.shape_cast %86 : vector<1x32xf32> to vector<32xf32>
    %88 = vector.shape_cast %87 : vector<32xf32> to vector<1x32xf32>
    %89 = vector.extract_strided_slice %1 {offsets = [8, 0], sizes = [1, 32], strides = [1, 1]} : vector<12x32xf32> to vector<1x32xf32>
    %90 = vector.shape_cast %89 : vector<1x32xf32> to vector<32xf32>
    %91 = vector.shape_cast %90 : vector<32xf32> to vector<1x32xf32>
    %92 = vector.extract_strided_slice %1 {offsets = [9, 0], sizes = [1, 32], strides = [1, 1]} : vector<12x32xf32> to vector<1x32xf32>
    %93 = vector.shape_cast %92 : vector<1x32xf32> to vector<32xf32>
    %94 = vector.shape_cast %93 : vector<32xf32> to vector<1x32xf32>
    %95 = vector.extract_strided_slice %1 {offsets = [10, 0], sizes = [1, 32], strides = [1, 1]} : vector<12x32xf32> to vector<1x32xf32>
    %96 = vector.shape_cast %95 : vector<1x32xf32> to vector<32xf32>
    %97 = vector.shape_cast %96 : vector<32xf32> to vector<1x32xf32>
    %98 = vector.extract_strided_slice %1 {offsets = [11, 0], sizes = [1, 32], strides = [1, 1]} : vector<12x32xf32> to vector<1x32xf32>
    %99 = vector.shape_cast %98 : vector<1x32xf32> to vector<32xf32>
    %100 = vector.shape_cast %99 : vector<32xf32> to vector<1x32xf32>
    %cst_20 = arith.constant dense<0.000000e+00> : vector<16xf32>
    %101 = vector.multi_reduction <add>, %59, %cst_20 [1] : vector<16x32xf32> to vector<16xf32>
    %102 = vector.shape_cast %101 : vector<16xf32> to vector<16x1xf32>
    %cst_21 = arith.constant 3.200000e+01 : f32
    %103 = vector.broadcast %cst_21 : f32 to vector<16x1xf32>
    %104 = arith.divf %102, %103 : vector<16x1xf32>
    %105 = vector.broadcast %104 : vector<16x1xf32> to vector<16x32xf32>
    %106 = arith.subf %59, %105 : vector<16x32xf32>
    %107 = arith.mulf %106, %106 : vector<16x32xf32>
    %cst_22 = arith.constant dense<0.000000e+00> : vector<16xf32>
    %108 = vector.multi_reduction <add>, %107, %cst_22 [1] : vector<16x32xf32> to vector<16xf32>
    %109 = vector.shape_cast %108 : vector<16xf32> to vector<16x1xf32>
    %cst_23 = arith.constant 3.200000e+01 : f32
    %110 = vector.broadcast %cst_23 : f32 to vector<16x1xf32>
    %111 = arith.divf %109, %110 : vector<16x1xf32>
    %cst_24 = arith.constant 9.99999974E-6 : f32
    %112 = vector.broadcast %cst_24 : f32 to vector<16x1xf32>
    %113 = arith.addf %111, %112 : vector<16x1xf32>
    %114 = math.rsqrt %113 : vector<16x1xf32>
    %115 = vector.broadcast %85 : vector<1x32xf32> to vector<16x32xf32>
    %116 = vector.broadcast %114 : vector<16x1xf32> to vector<16x32xf32>
    %117 = arith.mulf %115, %116 : vector<16x32xf32>
    %118 = arith.mulf %106, %117 : vector<16x32xf32>
    %119 = vector.broadcast %88 : vector<1x32xf32> to vector<16x32xf32>
    %120 = arith.addf %118, %119 : vector<16x32xf32>
    %cst_25 = arith.constant dense<0.000000e+00> : vector<16xf32>
    %121 = vector.multi_reduction <add>, %120, %cst_25 [1] : vector<16x32xf32> to vector<16xf32>
    %122 = vector.shape_cast %121 : vector<16xf32> to vector<16x1xf32>
    %cst_26 = arith.constant 3.200000e+01 : f32
    %123 = vector.broadcast %cst_26 : f32 to vector<16x1xf32>
    %124 = arith.divf %122, %123 : vector<16x1xf32>
    %125 = vector.broadcast %124 : vector<16x1xf32> to vector<16x32xf32>
    %126 = arith.subf %120, %125 : vector<16x32xf32>
    %127 = arith.mulf %126, %126 : vector<16x32xf32>
    %cst_27 = arith.constant dense<0.000000e+00> : vector<16xf32>
    %128 = vector.multi_reduction <add>, %127, %cst_27 [1] : vector<16x32xf32> to vector<16xf32>
    %129 = vector.shape_cast %128 : vector<16xf32> to vector<16x1xf32>
    %cst_28 = arith.constant 3.200000e+01 : f32
    %130 = vector.broadcast %cst_28 : f32 to vector<16x1xf32>
    %131 = arith.divf %129, %130 : vector<16x1xf32>
    %cst_29 = arith.constant 9.99999974E-6 : f32
    %132 = vector.broadcast %cst_29 : f32 to vector<16x1xf32>
    %133 = arith.addf %131, %132 : vector<16x1xf32>
    %134 = math.rsqrt %133 : vector<16x1xf32>
    %135 = vector.broadcast %91 : vector<1x32xf32> to vector<16x32xf32>
    %136 = vector.broadcast %134 : vector<16x1xf32> to vector<16x32xf32>
    %137 = arith.mulf %135, %136 : vector<16x32xf32>
    %138 = arith.mulf %126, %137 : vector<16x32xf32>
    %139 = vector.broadcast %94 : vector<1x32xf32> to vector<16x32xf32>
    %140 = arith.addf %138, %139 : vector<16x32xf32>
    %cst_30 = arith.constant dense<0.000000e+00> : vector<16xf32>
    %141 = vector.multi_reduction <add>, %140, %cst_30 [1] : vector<16x32xf32> to vector<16xf32>
    %142 = vector.shape_cast %141 : vector<16xf32> to vector<16x1xf32>
    %cst_31 = arith.constant 3.200000e+01 : f32
    %143 = vector.broadcast %cst_31 : f32 to vector<16x1xf32>
    %144 = arith.divf %142, %143 : vector<16x1xf32>
    %145 = vector.broadcast %144 : vector<16x1xf32> to vector<16x32xf32>
    %146 = arith.subf %140, %145 : vector<16x32xf32>
    %147 = arith.mulf %146, %146 : vector<16x32xf32>
    %cst_32 = arith.constant dense<0.000000e+00> : vector<16xf32>
    %148 = vector.multi_reduction <add>, %147, %cst_32 [1] : vector<16x32xf32> to vector<16xf32>
    %149 = vector.shape_cast %148 : vector<16xf32> to vector<16x1xf32>
    %cst_33 = arith.constant 3.200000e+01 : f32
    %150 = vector.broadcast %cst_33 : f32 to vector<16x1xf32>
    %151 = arith.divf %149, %150 : vector<16x1xf32>
    %cst_34 = arith.constant 9.99999974E-6 : f32
    %152 = vector.broadcast %cst_34 : f32 to vector<16x1xf32>
    %153 = arith.addf %151, %152 : vector<16x1xf32>
    %154 = math.rsqrt %153 : vector<16x1xf32>
    %155 = vector.broadcast %97 : vector<1x32xf32> to vector<16x32xf32>
    %156 = vector.broadcast %154 : vector<16x1xf32> to vector<16x32xf32>
    %157 = arith.mulf %155, %156 : vector<16x32xf32>
    %158 = arith.mulf %146, %157 : vector<16x32xf32>
    %159 = vector.broadcast %100 : vector<1x32xf32> to vector<16x32xf32>
    %160 = arith.addf %158, %159 : vector<16x32xf32>
    %c1 = arith.constant 1 : index
    %c0_35 = arith.constant 0 : index
    %c0_36 = arith.constant 0 : index
    %161 = vector.load %arg3[%c1, %c0_35, %c0_36] : memref<2x16x32xf32, #tpu.memory_space<vmem>>, vector<1x16x32xf32>
    %162 = vector.shape_cast %161 : vector<1x16x32xf32> to vector<16x32xf32>
    %163 = vector.shape_cast %160 : vector<16x32xf32> to vector<1x16x32xf32>
    tpu.vector_store %arg3[%c1, %c0_35, %c0_36], %163 {strides = array<i32>} : memref<2x16x32xf32, #tpu.memory_space<vmem>>, vector<1x16x32xf32>,
    return
  }
  func.func @transform_0(%arg0: i32) -> (i32, i32) {
    %c0_i32 = arith.constant 0 : i32
    %c0_i32_0 = arith.constant 0 : i32
    return %arg0, %c0_i32 : i32, i32
  }
  func.func @transform_1(%arg0: i32) -> (i32, i32) {
    %c0_i32 = arith.constant 0 : i32
    %c0_i32_0 = arith.constant 0 : i32
    %c0_i32_1 = arith.constant 0 : i32
    return %c0_i32, %c0_i32_0 : i32, i32
  }
  func.func @transform_2(%arg0: i32) -> (i32, i32, i32) {
    %c0_i32 = arith.constant 0 : i32
    %c0_i32_0 = arith.constant 0 : i32
    %c0_i32_1 = arith.constant 0 : i32
    return %c0_i32, %arg0, %c0_i32_0 : i32, i32, i32
  }
}

</mosaic_0001>

<llo_original>
// kernel: tpu_custom_call.1
$region0: #{tpu_custom_call.1}
  #allocation0 [shape = 'u32[]', space=smem, size = 0x4, offset = 0x4, fixed_abs, tag = 'smem constant byte address 0x4 - core index']
  #allocation1 [shape = 'u32[144,128]{1,0:T(1,128)}', space=vmem, size = 0x12000, scoped, tag = 'internal scratch']
  %s0 = inlined_call_operand.hbm [shape: f32[16,32], index: 0, kind: input, shape index: {}]
  %s1 = inlined_call_operand.hbm [shape: f32[12,32], index: 1, kind: input, shape index: {}]
  %s2 = inlined_call_operand.hbm [shape: f32[2,16,32], index: 2, kind: output, shape index: {}]
  %s3 = sld [smem:[#allocation0]]
  $region26: #{tpu_custom_call.1} parent=0
    _
  %s5 = ssub.s32 1, %s3
  %s6 = scalar_select 0, %s5, %s3
  $region1: #{tpu_custom_call.1} parent=0
    #allocation2 [shape = 'u8[8192]{0}', space=vmem, size = 0x2000, scoped, tag = 'input window, operand 0, single buffered']
    #allocation3 [shape = 's32[1]{0}', space=sflag, size = 0x4, scoped, tag = 'scoped memory for tpu_custom_call.1']
    #allocation4 [shape = 's32[1]{0}', space=sflag, size = 0x4, scoped, tag = 'scoped memory for tpu_custom_call.1']
    #allocation5 [shape = 'u8[8192]{0}', space=vmem, size = 0x2000, scoped, tag = 'input window, operand 1, single buffered']
    #allocation6 [shape = 's32[1]{0}', space=sflag, size = 0x4, scoped, tag = 'scoped memory for tpu_custom_call.1']
    #allocation7 [shape = 'u8[16384]{0}', space=vmem, size = 0x4000, scoped, tag = 'output window, operand 0, single buffered']
    %7 = vsyncpa [#allocation3], 0
    %8 = vsyncpa [#allocation6], 0
    %9 = vsyncpa [#allocation4], 0
    // Predicated region
    $region2: #{tpu_custom_call.1} parent=1 // pred_check
      _
    $region3: #{tpu_custom_call.1} parent=1 // pred_check_branch
      %11 = sbr.rel (0) target = $region5
    $region4: #{tpu_custom_call.1} parent=1 // pred_region
      %s13 = ssub.s32 256, 256
      %14 = vsyncadd [#allocation3], %s13
      %s15 = sshll.u32 [#allocation2], 4
      %s16 = int_to_ptr.vmem [resolvable:$true] %s15
      %21 = dma.hbm_to_vmem [thread:$0]  %s0, 256, %s16, [#allocation3], 128, 128, 8
    $region5: #{tpu_custom_call.1} parent=1 // pred_fallthru
      _
    // Predicated region
    $region6: #{tpu_custom_call.1} parent=1 // pred_check
      _
    $region7: #{tpu_custom_call.1} parent=1 // pred_check_branch
      %23 = sbr.rel (0) target = $region9
    $region8: #{tpu_custom_call.1} parent=1 // pred_region
      %s25 = ssub.s32 256, 256
      %26 = vsyncadd [#allocation6], %s25
      %s27 = sshll.u32 [#allocation5], 4
      %s28 = int_to_ptr.vmem [resolvable:$true] %s27
      %33 = dma.hbm_to_vmem [thread:$0]  %s1, 256, %s28, [#allocation6], 128, 128, 8
    $region9: #{tpu_custom_call.1} parent=1 // pred_fallthru
      _
    // Predicated region
    $region10: #{tpu_custom_call.1} parent=1 // pred_check
      _
    $region11: #{tpu_custom_call.1} parent=1 // pred_check_branch
      %35 = sbr.rel (0) target = $region13
    $region12: #{tpu_custom_call.1} parent=1 // pred_region
      %36 = dma.done [#allocation3], 256
    $region13: #{tpu_custom_call.1} parent=1 // pred_fallthru
      _
    // Predicated region
    $region14: #{tpu_custom_call.1} parent=1 // pred_check
      _
    $region15: #{tpu_custom_call.1} parent=1 // pred_check_branch
      %38 = sbr.rel (0) target = $region17
    $region16: #{tpu_custom_call.1} parent=1 // pred_region
      %39 = dma.done [#allocation6], 256
    $region17: #{tpu_custom_call.1} parent=1 // pred_fallthru
      _
    %v40 = vld [vmem:[#allocation2] sm:$0xff]
    %v41 = vld [vmem:[#allocation2 + $0x8] sm:$0xff]
    %v42 = vld [vmem:[#allocation5] sm:$0xff]
    %v43 = vld [vmem:[#allocation5 + $0x8] sm:$0xf]
    %vm44 = vcmask 261120
    %v45 = vsel %vm44, %v40, 0.0
    %46 = vadd.xlane.f32.xlu0 %v45
    %v47 = vpop.xlane.xlu0 %46
    %v48 = vsel %vm44, %v41, 0.0
    %49 = vadd.xlane.f32.xlu0 %v48
    %v50 = vpop.xlane.xlu0 %49
    %v51 = vrcp.pop 32.0
    %v52 = vmul.f32 %v47, %v51
    %v53 = vmul.f32 %v50, %v51
    %v54 = vsub.f32 %v40, %v52
    %v55 = vsub.f32 %v41, %v53
    %v56 = vmul.f32 %v54, %v54
    %v57 = vmul.f32 %v55, %v55
    %v58 = vsel %vm44, %v56, 0.0
    %59 = vadd.xlane.f32.xlu0 %v58
    %v60 = vpop.xlane.xlu0 %59
    %v61 = vsel %vm44, %v57, 0.0
    %62 = vadd.xlane.f32.xlu0 %v61
    %v63 = vpop.xlane.xlu0 %62
    %v64 = vmul.f32 %v60, %v51
    %v65 = vmul.f32 %v63, %v51
    %v66 = vadd.f32 %v64, 1e-05
    %v67 = vadd.f32 %v65, 1e-05
    %v68 = vrsqrt.pop %v66
    %v69 = vrsqrt.pop %v67
    %v70 = vlaneseq
    %v71 = vshrl.u32 %v70, 7
    %v72 = vsub.s32 0, %v71
    %v73 = vrot.slane %v42, %v72
    %v74 = vmul.f32 %v73, %v68
    %v75 = vmul.f32 %v73, %v69
    %v76 = vmul.f32 %v54, %v74
    %v77 = vmul.f32 %v55, %v75
    %v78 = vlaneseq
    %v79 = vshrl.u32 %v78, 7
    %v80 = vsub.s32 1, %v79
    %v81 = vrot.slane %v42, %v80
    %v82 = vadd.f32 %v76, %v81
    %v83 = vadd.f32 %v77, %v81
    %v84 = vsel %vm44, %v82, 0.0
    %85 = vadd.xlane.f32.xlu0 %v84
    %v86 = vpop.xlane.xlu0 %85
    %v87 = vsel %vm44, %v83, 0.0
    %88 = vadd.xlane.f32.xlu0 %v87
    %v89 = vpop.xlane.xlu0 %88
    %v90 = vmul.f32 %v86, %v51
    %v91 = vmul.f32 %v89, %v51
    %v92 = vsub.f32 %v82, %v90
    %v93 = vsub.f32 %v83, %v91
    %v94 = vmul.f32 %v92, %v92
    %v95 = vmul.f32 %v93, %v93
    %v96 = vsel %vm44, %v94, 0.0
    %97 = vadd.xlane.f32.xlu0 %v96
    %v98 = vpop.xlane.xlu0 %97
    %v99 = vsel %vm44, %v95, 0.0
    %100 = vadd.xlane.f32.xlu0 %v99
    %v101 = vpop.xlane.xlu0 %100
    %v102 = vmul.f32 %v98, %v51
    %v103 = vmul.f32 %v101, %v51
    %v104 = vadd.f32 %v102, 1e-05
    %v105 = vadd.f32 %v103, 1e-05
    %v106 = vrsqrt.pop %v104
    %v107 = vrsqrt.pop %v105
    %v108 = vlaneseq
    %v109 = vshrl.u32 %v108, 7
    %v110 = vsub.s32 2, %v109
    %v111 = vrot.slane %v42, %v110
    %v112 = vmul.f32 %v111, %v106
    %v113 = vmul.f32 %v111, %v107
    %v114 = vmul.f32 %v92, %v112
    %v115 = vmul.f32 %v93, %v113
    %v116 = vlaneseq
    %v117 = vshrl.u32 %v116, 7
    %v118 = vsub.s32 3, %v117
    %v119 = vrot.slane %v42, %v118
    %v120 = vadd.f32 %v114, %v119
    %v121 = vadd.f32 %v115, %v119
    %v122 = vsel %vm44, %v120, 0.0
    %123 = vadd.xlane.f32.xlu0 %v122
    %v124 = vpop.xlane.xlu0 %123
    %v125 = vsel %vm44, %v121, 0.0
    %126 = vadd.xlane.f32.xlu0 %v125
    %v127 = vpop.xlane.xlu0 %126
    %v128 = vmul.f32 %v124, %v51
    %v129 = vmul.f32 %v127, %v51
    %v130 = vsub.f32 %v120, %v128
    %v131 = vsub.f32 %v121, %v129
    %v132 = vmul.f32 %v130, %v130
    %v133 = vmul.f32 %v131, %v131
    %v134 = vsel %vm44, %v132, 0.0
    %135 = vadd.xlane.f32.xlu0 %v134
    %v136 = vpop.xlane.xlu0 %135
    %v137 = vsel %vm44, %v133, 0.0
    %138 = vadd.xlane.f32.xlu0 %v137
    %v139 = vpop.xlane.xlu0 %138
    %v140 = vmul.f32 %v136, %v51
    %v141 = vmul.f32 %v139, %v51
    %v142 = vadd.f32 %v140, 1e-05
    %v143 = vadd.f32 %v141, 1e-05
    %v144 = vrsqrt.pop %v142
    %v145 = vrsqrt.pop %v143
    %v146 = vlaneseq
    %v147 = vshrl.u32 %v146, 7
    %v148 = vsub.s32 4, %v147
    %v149 = vrot.slane %v42, %v148
    %v150 = vmul.f32 %v149, %v144
    %v151 = vmul.f32 %v149, %v145
    %v152 = vmul.f32 %v130, %v150
    %v153 = vmul.f32 %v131, %v151
    %v154 = vlaneseq
    %v155 = vshrl.u32 %v154, 7
    %v156 = vsub.s32 5, %v155
    %v157 = vrot.slane %v42, %v156
    %v158 = vadd.f32 %v152, %v157
    %v159 = vadd.f32 %v153, %v157
    %160 = vst.msk [vmem:[#allocation7] sm:$0xff] %vm44, %v158
    %161 = vst.msk [vmem:[#allocation7 + $0x8] sm:$0xff] %vm44, %v159
    %v162 = vlaneseq
    %v163 = vshrl.u32 %v162, 7
    %v164 = vsub.s32 6, %v163
    %v165 = vrot.slane %v42, %v164
    %v166 = vmul.f32 %v165, %v144
    %v167 = vmul.f32 %v165, %v145
    %v168 = vmul.f32 %v130, %v166
    %v169 = vmul.f32 %v131, %v167
    %v170 = vlaneseq
    %v171 = vshrl.u32 %v170, 7
    %v172 = vsub.s32 7, %v171
    %v173 = vrot.slane %v42, %v172
    %v174 = vadd.f32 %v168, %v173
    %v175 = vadd.f32 %v169, %v173
    %v176 = vsel %vm44, %v174, 0.0
    %177 = vadd.xlane.f32.xlu0 %v176
    %v178 = vpop.xlane.xlu0 %177
    %v179 = vsel %vm44, %v175, 0.0
    %180 = vadd.xlane.f32.xlu0 %v179
    %v181 = vpop.xlane.xlu0 %180
    %v182 = vmul.f32 %v178, %v51
    %v183 = vmul.f32 %v181, %v51
    %v184 = vsub.f32 %v174, %v182
    %v185 = vsub.f32 %v175, %v183
    %v186 = vmul.f32 %v184, %v184
    %v187 = vmul.f32 %v185, %v185
    %v188 = vsel %vm44, %v186, 0.0
    %189 = vadd.xlane.f32.xlu0 %v188
    %v190 = vpop.xlane.xlu0 %189
    %v191 = vsel %vm44, %v187, 0.0
    %192 = vadd.xlane.f32.xlu0 %v191
    %v193 = vpop.xlane.xlu0 %192
    %v194 = vmul.f32 %v190, %v51
    %v195 = vmul.f32 %v193, %v51
    %v196 = vadd.f32 %v194, 1e-05
    %v197 = vadd.f32 %v195, 1e-05
    %v198 = vrsqrt.pop %v196
    %v199 = vrsqrt.pop %v197
    %v200 = vlaneseq
    %v201 = vshrl.u32 %v200, 7
    %v202 = vsub.s32 0, %v201
    %v203 = vrot.slane %v43, %v202
    %v204 = vmul.f32 %v203, %v198
    %v205 = vmul.f32 %v203, %v199
    %v206 = vmul.f32 %v184, %v204
    %v207 = vmul.f32 %v185, %v205
    %v208 = vlaneseq
    %v209 = vshrl.u32 %v208, 7
    %v210 = vsub.s32 1, %v209
    %v211 = vrot.slane %v43, %v210
    %v212 = vadd.f32 %v206, %v211
    %v213 = vadd.f32 %v207, %v211
    %v214 = vsel %vm44, %v212, 0.0
    %215 = vadd.xlane.f32.xlu0 %v214
    %v216 = vpop.xlane.xlu0 %215
    %v217 = vsel %vm44, %v213, 0.0
    %218 = vadd.xlane.f32.xlu0 %v217
    %v219 = vpop.xlane.xlu0 %218
    %v220 = vmul.f32 %v216, %v51
    %v221 = vmul.f32 %v219, %v51
    %v222 = vsub.f32 %v212, %v220
    %v223 = vsub.f32 %v213, %v221
    %v224 = vmul.f32 %v222, %v222
    %v225 = vmul.f32 %v223, %v223
    %v226 = vsel %vm44, %v224, 0.0
    %227 = vadd.xlane.f32.xlu0 %v226
    %v228 = vpop.xlane.xlu0 %227
    %v229 = vsel %vm44, %v225, 0.0
    %230 = vadd.xlane.f32.xlu0 %v229
    %v231 = vpop.xlane.xlu0 %230
    %v232 = vmul.f32 %v228, %v51
    %v233 = vmul.f32 %v231, %v51
    %v234 = vadd.f32 %v232, 1e-05
    %v235 = vadd.f32 %v233, 1e-05
    %v236 = vrsqrt.pop %v234
    %v237 = vrsqrt.pop %v235
    %v238 = vlaneseq
    %v239 = vshrl.u32 %v238, 7
    %v240 = vsub.s32 2, %v239
    %v241 = vrot.slane %v43, %v240
    %v242 = vmul.f32 %v241, %v236
    %v243 = vmul.f32 %v241, %v237
    %v244 = vmul.f32 %v222, %v242
    %v245 = vmul.f32 %v223, %v243
    %v246 = vlaneseq
    %v247 = vshrl.u32 %v246, 7
    %v248 = vsub.s32 3, %v247
    %v249 = vrot.slane %v43, %v248
    %v250 = vadd.f32 %v244, %v249
    %v251 = vadd.f32 %v245, %v249
    %s252 = scalar_lea.vmem [#allocation7], 16
    %253 = vst.msk [vmem:[%s252] sm:$0xff] %vm44, %v250
    %254 = vst.msk [vmem:[%s252 + $0x8] sm:$0xff] %vm44, %v251
    // Predicated region
    $region18: #{tpu_custom_call.1} parent=1 // pred_check
      _
    $region19: #{tpu_custom_call.1} parent=1 // pred_check_branch
      %256 = sbr.rel (0) target = $region21
    $region20: #{tpu_custom_call.1} parent=1 // pred_region
      %s258 = ssub.s32 512, 512
      %259 = vsyncadd [#allocation4], %s258
      %s260 = sshll.u32 [#allocation7], 4
      %s261 = int_to_ptr.vmem [resolvable:$true] %s260
      %266 = dma.vmem_to_hbm [thread:$0]  %s261, 512, %s2, [#allocation4], 128, 128, 8
    $region21: #{tpu_custom_call.1} parent=1 // pred_fallthru
      _
    // Predicated region
    $region22: #{tpu_custom_call.1} parent=1 // pred_check
      _
    $region23: #{tpu_custom_call.1} parent=1 // pred_check_branch
      %268 = sbr.rel (0) target = $region25
    $region24: #{tpu_custom_call.1} parent=1 // pred_region
      %269 = dma.done [#allocation4], 512
    $region25: #{tpu_custom_call.1} parent=1 // pred_fallthru
      _
    %270 = vsyncpa [#allocation3], 1
    %271 = vsyncpa [#allocation6], 1
    %272 = vsyncpa [#allocation4], 1

</llo_original>
